<compile_context>
chip_gen: v7x
topology: tpu7x:2x2x1
jax: 0.10.0
libtpu: 0.0.40
codegen_flags: <defaults>
</compile_context>

<pallas_src>
import functools

import jax
import jax.numpy as jnp
import numpy as np
from jax.experimental import pallas as pl
from jax.experimental.pallas import tpu as pltpu


def _cbs_loss_kernel(img_ref, txtn_ref, out_ref, *, threshold, num_rows, tile_m):
    # img_ref : [TM, D]     image-feature tile (un-normalized, native dtype)
    # txtn_ref: [T_pad, D]  pre-normalized background text features (resident,
    #                        zero rows beyond the real T)
    # out_ref : [1, 128]    per-tile partial loss (scalar broadcast across lanes)
    i = pl.program_id(0)

    img = img_ref[...]
    img_f32 = img.astype(jnp.float32)

    # Un-normalized logits on the MXU — contraction over the last axis of both
    # operands (no materialized transpose of the text block).
    raw = jax.lax.dot_general(
        img, txtn_ref[...],
        dimension_numbers=(((1,), (1,)), ((), ())),
        preferred_element_type=jnp.float32)          # [TM, T_pad] f32

    # Apply the image-row L2 normalization as a cheap post-matmul row scale
    # (rsqrt goes to the EUP slot; the multiply is TM x T_pad, ~D/T x less work
    # than normalizing the TM x D tile before the matmul).
    inv_norm = jax.lax.rsqrt(
        jnp.sum(img_f32 * img_f32, axis=-1, keepdims=True))   # [TM, 1]
    logits = raw * inv_norm

    # Authoritative valid-row mask (boundary block tail rows are undefined with
    # the unpadded input), fused with the threshold mask.  Any NaN/Inf produced
    # by garbage rows compares False and is selected away by the where.
    row = i * tile_m + jax.lax.broadcasted_iota(jnp.int32, logits.shape, 0)
    active = jnp.logical_and(row < num_rows, logits > threshold)

    # loss contribution: -(log(1 - logit)) where active, else 0.
    # (log1p(-x) would be bit-equivalent here since active logits > threshold.)
    contrib = jnp.where(active, jnp.log(1.0 - logits), 0.0)
    partial = -jnp.sum(contrib)

    # Lane-dense per-tile partial (all 128 lanes carry the same scalar).
    out_ref[...] = jnp.broadcast_to(partial, out_ref.shape).astype(out_ref.dtype)


def cbs_loss(image_features, text_features, threshold=0.26, tile_m=512):
    """Background suppression loss on pre-encoded features (Pallas kernel).

    Note: `threshold` and the batch size are baked in as compile-time
    constants (changing them recompiles); pass them as SMEM scalars if they
    must vary at runtime.
    """
    n, d = image_features.shape
    t, d2 = text_features.shape
    assert d == d2, "feature dims must match"

    # Hoist the grid-invariant text normalization ([T, D] is tiny) out of the
    # per-tile kernel path; keep the native dtype for the MXU operand.
    txt_f32 = text_features.astype(jnp.float32)
    txt_inv = jax.lax.rsqrt(jnp.sum(txt_f32 * txt_f32, axis=-1, keepdims=True))
    txt_n = (txt_f32 * txt_inv).astype(text_features.dtype)

    # Zero-pad the text matrix to a multiple of 128 rows so the [TM, T_pad]
    # logits epilogue is lane-dense.  Padded rows are exactly zero (padding is
    # applied AFTER normalization, so no 0 * inf NaNs): their logits are 0 and
    # log(1 - 0) == 0, so they never contribute regardless of threshold sign.
    t_pad = ((t + 127) // 128) * 128
    if t_pad != t:
        txt_n = jnp.pad(txt_n, ((0, t_pad - t), (0, 0)))

    # Row tile: multiple of 8 sublanes (f32), default 512 (HBM roofline knee).
    tile_m = max(8, (tile_m // 8) * 8)
    tm = min(tile_m, max(8, ((n + 7) // 8) * 8))
    # Keep >= 2 grid steps for non-tiny batches so a v7x chip's two TensorCores
    # both get work (no-op on single-TC v5e/v6e, skipped for tiny batches).
    if n > 256 and pl.cdiv(n, tm) == 1:
        tm = max(8, ((pl.cdiv(n, 2) + 7) // 8) * 8)
    num_tiles = pl.cdiv(n, tm)
    # NOTE: no jnp.pad of image_features — boundary-block garbage rows are
    # masked in-kernel via `row < num_rows`.

    kernel = functools.partial(_cbs_loss_kernel, threshold=threshold,
                               num_rows=n, tile_m=tm)

    # Right-size the scoped-VMEM ask: double-buffered image tile + resident
    # text block + outputs, with 2x margin, clamped to [16 MiB, 64 MiB].
    img_itemsize = jnp.dtype(image_features.dtype).itemsize
    txt_itemsize = jnp.dtype(txt_n.dtype).itemsize
    vmem_usage = (2 * tm * d * img_itemsize
                  + 2 * t_pad * d * txt_itemsize
                  + 2 * 128 * 4)
    vmem_limit = int(min(64 * 1024 * 1024, max(16 * 1024 * 1024, 2 * vmem_usage)))

    partials = pl.pallas_call(
        kernel,
        out_shape=jax.ShapeDtypeStruct((1, num_tiles * 128), jnp.float32),
        grid=(num_tiles,),
        in_specs=[
            pl.BlockSpec((tm, d), lambda i: (i, 0)),      # image tile i (pipelined)
            pl.BlockSpec((t_pad, d), lambda i: (0, 0)),   # text block resident
        ],
        out_specs=pl.BlockSpec((1, 128), lambda i: (0, i)),
        compiler_params=pltpu.CompilerParams(
            dimension_semantics=("parallel",),            # each tile independent
            vmem_limit_bytes=vmem_limit),
    )(image_features, txt_n)

    # Each grid step broadcast its partial across one 128-lane block; take lane
    # 0 of each block and reduce (num_tiles scalars — negligible).
    return jnp.sum(partials.reshape(num_tiles, 128)[:, 0])


def _reference_loss(image_features, text_features, threshold=0.26):
    img = image_features.astype(jnp.float32)
    txt = text_features.astype(jnp.float32)
    img = img / jnp.linalg.norm(img, axis=-1, keepdims=True)
    txt = txt / jnp.linalg.norm(txt, axis=-1, keepdims=True)
    logits = jnp.matmul(img, txt.T, precision=jax.lax.Precision.HIGHEST)
    mask = jnp.where(logits > threshold, 1.0, 0.0)
    return -jnp.sum(jnp.log(1.0 - logits) * mask)


if __name__ == "__main__":
    key = jax.random.PRNGKey(0)
    k_img, k_wimg, k_txt, k_feat, k_feat3 = jax.random.split(key, 5)

    # --- Case 1: module-shaped pipeline (batch=2 NCHW images, D=128, T=8). ---
    N, C, H, W = 2, 3, 16, 16
    D, T = 128, 8

    images = jax.random.normal(k_img, (N, C, H, W), dtype=jnp.float32)
    # Synthetic deterministic "encoders" (plain-JAX glue standing in for CLIP):
    w_img = jax.random.normal(k_wimg, (C * H * W, D), dtype=jnp.float32) * 0.02
    image_features = images.reshape(N, C * H * W) @ w_img
    text_features = jax.random.normal(k_txt, (T, D), dtype=jnp.float32)

    loss = cbs_loss(image_features, text_features, threshold=0.26)
    loss = jax.block_until_ready(loss)
    ref = _reference_loss(image_features, text_features, threshold=0.26)
    np.testing.assert_allclose(np.asarray(loss), np.asarray(ref),
                               rtol=1e-4, atol=1e-5)

    # --- Case 2: multi-tile + ragged (unpadded) boundary block (N=20, TM=8). ---
    feats2 = jax.random.normal(k_feat, (20, D), dtype=jnp.float32)
    loss2 = cbs_loss(feats2, text_features, threshold=0.1, tile_m=8)
    loss2 = jax.block_until_ready(loss2)
    ref2 = _reference_loss(feats2, text_features, threshold=0.1)
    np.testing.assert_allclose(np.asarray(loss2), np.asarray(ref2),
                               rtol=1e-4, atol=1e-5)

    # --- Case 3: default tile path with the num_tiles>=2 split (N=300). -------
    feats3 = jax.random.normal(k_feat3, (300, D), dtype=jnp.float32)
    loss3 = cbs_loss(feats3, text_features, threshold=0.1)
    loss3 = jax.block_until_ready(loss3)
    ref3 = _reference_loss(feats3, text_features, threshold=0.1)
    np.testing.assert_allclose(np.asarray(loss3), np.asarray(ref3),
                               rtol=1e-4, atol=1e-5)

    print("KERNEL_OK")
</pallas_src>

<mosaic_0001>
module attributes {stable_mosaic.version = 11 : i64} {
  func.func @_cbs_loss_kernel(%arg0: i32, %arg1: memref<8x128xf32, #tpu.memory_space<vmem>>, %arg2: memref<128x128xf32, #tpu.memory_space<vmem>>, %arg3: memref<1x128xf32, #tpu.memory_space<vmem>>) attributes {dimension_semantics = [#tpu.dimension_semantics<parallel>], iteration_bounds = array<i64: 1>, scalar_prefetch = 0 : i64, scratch_operands = 0 : i64, tpu.core_type = #tpu.core_type<tc>, window_params = [{transform_indices = @transform_0, window_bounds = array<i64: 8, 128>}, {pipeline_mode = #tpu.pipeline_mode<synchronous>, transform_indices = @transform_1, window_bounds = array<i64: 128, 128>}, {transform_indices = @transform_2, window_bounds = array<i64: 1, 128>}]} {
    %c0 = arith.constant 0 : index
    %c0_0 = arith.constant 0 : index
    %0 = vector.load %arg1[%c0, %c0_0] : memref<8x128xf32, #tpu.memory_space<vmem>>, vector<8x128xf32>
    %c0_1 = arith.constant 0 : index
    %c0_2 = arith.constant 0 : index
    %1 = vector.load %arg2[%c0_1, %c0_2] : memref<128x128xf32, #tpu.memory_space<vmem>>, vector<128x128xf32>
    %cst = arith.constant dense<0.000000e+00> : vector<8x128xf32>
    %2 = tpu.matmul %0, %1, %cst {dimension_numbers = #tpu.dot_dimension_numbers<[1], [1], [0], [0], [0, 0, 1, 0], [], []>} : vector<8x128xf32>, vector<128x128xf32>, vector<8x128xf32> -> vector<8x128xf32>
    %3 = arith.mulf %0, %0 : vector<8x128xf32>
    %cst_3 = arith.constant dense<0.000000e+00> : vector<8xf32>
    %4 = vector.multi_reduction <add>, %3, %cst_3 [1] : vector<8x128xf32> to vector<8xf32>
    %5 = vector.shape_cast %4 : vector<8xf32> to vector<8x1xf32>
    %6 = math.rsqrt %5 : vector<8x1xf32>
    %7 = vector.broadcast %6 : vector<8x1xf32> to vector<8x128xf32>
    %8 = arith.mulf %2, %7 : vector<8x128xf32>
    %c8_i32 = arith.constant 8 : i32
    %9 = arith.muli %arg0, %c8_i32 : i32
    %10 = tpu.iota {dimensions = array<i32: 0>} : vector<8x128xi32>
    %11 = vector.broadcast %9 : i32 to vector<8x128xi32>
    %12 = arith.addi %11, %10 : vector<8x128xi32>
    %c2_i32 = arith.constant 2 : i32
    %13 = vector.broadcast %c2_i32 : i32 to vector<8x128xi32>
    %14 = arith.cmpi slt, %12, %13 : vector<8x128xi32>
    %cst_4 = arith.constant 2.600000e-01 : f32
    %15 = vector.broadcast %cst_4 : f32 to vector<8x128xf32>
    %16 = arith.cmpf ogt, %8, %15 : vector<8x128xf32>
    %17 = arith.andi %14, %16 : vector<8x128xi1>
    %cst_5 = arith.constant 1.000000e+00 : f32
    %18 = vector.broadcast %cst_5 : f32 to vector<8x128xf32>
    %19 = arith.subf %18, %8 : vector<8x128xf32>
    %20 = math.log %19 : vector<8x128xf32>
    %cst_6 = arith.constant 0.000000e+00 : f32
    %21 = vector.broadcast %cst_6 : f32 to vector<8x128xf32>
    %22 = arith.select %17, %20, %21 : vector<8x128xi1>, vector<8x128xf32>
    %23 = vector.shape_cast %22 : vector<8x128xf32> to vector<1x8x128xf32>
    %cst_7 = arith.constant dense<0.000000e+00> : vector<1xf32>
    %24 = vector.multi_reduction <add>, %23, %cst_7 [1, 2] : vector<1x8x128xf32> to vector<1xf32>
    %25 = vector.shape_cast %24 : vector<1xf32> to vector<1x1x1xf32>
    %26 = vector.extract %25[0, 0, 0] : f32 from vector<1x1x1xf32>
    %cst_8 = arith.constant 0.000000e+00 : f32
    %27 = arith.subf %cst_8, %26 : f32
    %28 = vector.broadcast %27 : f32 to vector<1x128xf32>
    %c0_9 = arith.constant 0 : index
    %c0_10 = arith.constant 0 : index
    %29 = vector.load %arg3[%c0_9, %c0_10] : memref<1x128xf32, #tpu.memory_space<vmem>>, vector<1x128xf32>
    tpu.vector_store %arg3[%c0_9, %c0_10], %28 {strides = array<i32>} : memref<1x128xf32, #tpu.memory_space<vmem>>, vector<1x128xf32>,
    return
  }
  func.func @transform_0(%arg0: i32) -> (i32, i32) {
    %c0_i32 = arith.constant 0 : i32
    %c0_i32_0 = arith.constant 0 : i32
    return %arg0, %c0_i32 : i32, i32
  }
  func.func @transform_1(%arg0: i32) -> (i32, i32) {
    %c0_i32 = arith.constant 0 : i32
    %c0_i32_0 = arith.constant 0 : i32
    %c0_i32_1 = arith.constant 0 : i32
    return %c0_i32, %c0_i32_0 : i32, i32
  }
  func.func @transform_2(%arg0: i32) -> (i32, i32) {
    %c0_i32 = arith.constant 0 : i32
    %c0_i32_0 = arith.constant 0 : i32
    return %c0_i32, %arg0 : i32, i32
  }
}

</mosaic_0001>

<llo_original>
// kernel: tpu_custom_call.1
$region0: #{tpu_custom_call.1}
  #allocation0 [shape = 'u32[]', space=smem, size = 0x4, offset = 0x4, fixed_abs, tag = 'smem constant byte address 0x4 - core index']
  #allocation1 [shape = 'u32[144,128]{1,0:T(1,128)}', space=vmem, size = 0x12000, scoped, tag = 'internal scratch']
  %s0 = inlined_call_operand.hbm [shape: f32[2,128], index: 0, kind: input, shape index: {}]
  %s1 = inlined_call_operand.hbm [shape: f32[128,128], index: 1, kind: input, shape index: {}]
  %s2 = inlined_call_operand.hbm [shape: f32[1,128], index: 2, kind: output, shape index: {}]
  %s3 = sld [smem:[#allocation0]]
  $region26: #{tpu_custom_call.1} parent=0
    _
  %s5 = ssub.s32 1, %s3
  %s6 = scalar_select 0, %s5, %s3
  $region1: #{tpu_custom_call.1} parent=0
    #allocation2 [shape = 'u8[4096]{0}', space=vmem, size = 0x1000, scoped, tag = 'input window, operand 0, single buffered']
    #allocation3 [shape = 's32[1]{0}', space=sflag, size = 0x4, scoped, tag = 'scoped memory for tpu_custom_call.1']
    #allocation4 [shape = 's32[1]{0}', space=sflag, size = 0x4, scoped, tag = 'scoped memory for tpu_custom_call.1']
    #allocation5 [shape = 'u8[65536]{0}', space=vmem, size = 0x10000, scoped, tag = 'input window, operand 1, single buffered']
    #allocation6 [shape = 's32[1]{0}', space=sflag, size = 0x4, scoped, tag = 'scoped memory for tpu_custom_call.1']
    #allocation7 [shape = 'u8[512]{0}', space=vmem, size = 0x400, scoped, tag = 'output window, operand 0, single buffered']
    %7 = vsyncpa [#allocation3], 0
    %8 = vsyncpa [#allocation6], 0
    %9 = vsyncpa [#allocation4], 0
    // Predicated region
    $region2: #{tpu_custom_call.1} parent=1 // pred_check
      _
    $region3: #{tpu_custom_call.1} parent=1 // pred_check_branch
      %11 = sbr.rel (0) target = $region5
    $region4: #{tpu_custom_call.1} parent=1 // pred_region
      %s13 = ssub.s32 128, 32
      %14 = vsyncadd [#allocation3], %s13
      %s15 = sshll.u32 [#allocation2], 4
      %s16 = int_to_ptr.vmem [resolvable:$true] %s15
      %21 = dma.hbm_to_vmem [thread:$0]  %s0, 32, %s16, [#allocation3], 32, 32, 2
    $region5: #{tpu_custom_call.1} parent=1 // pred_fallthru
      _
    // Predicated region
    $region6: #{tpu_custom_call.1} parent=1 // pred_check
      _
    $region7: #{tpu_custom_call.1} parent=1 // pred_check_branch
      %23 = sbr.rel (0) target = $region9
    $region8: #{tpu_custom_call.1} parent=1 // pred_region
      %s25 = ssub.s32 2048, 2048
      %26 = vsyncadd [#allocation6], %s25
      %s27 = sshll.u32 [#allocation5], 4
      %s28 = int_to_ptr.vmem [resolvable:$true] %s27
      %33 = dma.hbm_to_vmem [thread:$0]  %s1, 2048, %s28, [#allocation6], 128, 128, 8
    $region9: #{tpu_custom_call.1} parent=1 // pred_fallthru
      _
    // Predicated region
    $region10: #{tpu_custom_call.1} parent=1 // pred_check
      _
    $region11: #{tpu_custom_call.1} parent=1 // pred_check_branch
      %35 = sbr.rel (0) target = $region13
    $region12: #{tpu_custom_call.1} parent=1 // pred_region
      %36 = dma.done [#allocation3], 128
    $region13: #{tpu_custom_call.1} parent=1 // pred_fallthru
      _
    // Predicated region
    $region14: #{tpu_custom_call.1} parent=1 // pred_check
      _
    $region15: #{tpu_custom_call.1} parent=1 // pred_check_branch
      %38 = sbr.rel (0) target = $region17
    $region16: #{tpu_custom_call.1} parent=1 // pred_region
      %39 = dma.done [#allocation6], 2048
    $region17: #{tpu_custom_call.1} parent=1 // pred_fallthru
      _
    %v40 = vld [vmem:[#allocation2] sm:$0xff]
    %v41 = vld [vmem:[#allocation5] sm:$0xff]
    %v42 = vld [vmem:[#allocation5 + $0x8] sm:$0xff]
    %v43 = vld [vmem:[#allocation5 + $0x10] sm:$0xff]
    %v44 = vld [vmem:[#allocation5 + $0x18] sm:$0xff]
    %v45 = vld [vmem:[#allocation5 + $0x20] sm:$0xff]
    %v46 = vld [vmem:[#allocation5 + $0x28] sm:$0xff]
    %v47 = vld [vmem:[#allocation5 + $0x30] sm:$0xff]
    %v48 = vld [vmem:[#allocation5 + $0x38] sm:$0xff]
    %v49 = vld [vmem:[#allocation5 + $0x40] sm:$0xff]
    %v50 = vld [vmem:[#allocation5 + $0x48] sm:$0xff]
    %v51 = vld [vmem:[#allocation5 + $0x50] sm:$0xff]
    %v52 = vld [vmem:[#allocation5 + $0x58] sm:$0xff]
    %v53 = vld [vmem:[#allocation5 + $0x60] sm:$0xff]
    %v54 = vld [vmem:[#allocation5 + $0x68] sm:$0xff]
    %v55 = vld [vmem:[#allocation5 + $0x70] sm:$0xff]
    %v56 = vld [vmem:[#allocation5 + $0x78] sm:$0xff]
    %57 = vmatprep.subr.mxu0 0.0
    %58 = vmatpush1.xpose.msra.mxu0 %v41
    %59 = vmatprep.subr.mxu0 0.0
    %60 = vmatpush1.xpose.msra.mxu0 %v42
    %61 = vmatprep.subr.mxu0 0.0
    %62 = vmatpush1.xpose.msra.mxu0 %v43
    %63 = vmatprep.subr.mxu0 0.0
    %64 = vmatpush1.xpose.msra.mxu0 %v44
    %65 = vmatprep.subr.mxu0 0.0
    %66 = vmatpush1.xpose.msra.mxu0 %v45
    %67 = vmatprep.subr.mxu0 0.0
    %68 = vmatpush1.xpose.msra.mxu0 %v46
    %69 = vmatprep.subr.mxu0 0.0
    %70 = vmatpush1.xpose.msra.mxu0 %v47
    %71 = vmatprep.subr.mxu0 0.0
    %72 = vmatpush1.xpose.msra.mxu0 %v48
    %73 = vmatprep.subr.mxu0 0.0
    %74 = vmatpush1.xpose.msra.mxu0 %v49
    %75 = vmatprep.subr.mxu0 0.0
    %76 = vmatpush1.xpose.msra.mxu0 %v50
    %77 = vmatprep.subr.mxu0 0.0
    %78 = vmatpush1.xpose.msra.mxu0 %v51
    %79 = vmatprep.subr.mxu0 0.0
    %80 = vmatpush1.xpose.msra.mxu0 %v52
    %81 = vmatprep.subr.mxu0 0.0
    %82 = vmatpush1.xpose.msra.mxu0 %v53
    %83 = vmatprep.subr.mxu0 0.0
    %84 = vmatpush1.xpose.msra.mxu0 %v54
    %85 = vmatprep.subr.mxu0 0.0
    %86 = vmatpush1.xpose.msra.mxu0 %v55
    %87 = vmatprep.subr.mxu0 0.0
    %88 = vmatpush1.xpose.msra.mxu0 %v56
    %89 = vmatprep.subr.mxu0 0.0
    %90 = vmatpush1.xpose.msra.mxu0 0.0
    %91 = vmatprep.subr.mxu0 0.0
    %92 = vmatpush1.xpose.msra.mxu0 0.0
    %93 = vmatprep.subr.mxu0 0.0
    %94 = vmatpush1.xpose.msra.mxu0 0.0
    %95 = vmatprep.subr.mxu0 0.0
    %96 = vmatpush1.xpose.msra.mxu0 0.0
    %97 = vmatprep.subr.mxu0 0.0
    %98 = vmatpush1.xpose.msra.mxu0 0.0
    %99 = vmatprep.subr.mxu0 0.0
    %100 = vmatpush1.xpose.msra.mxu0 0.0
    %101 = vmatprep.subr.mxu0 0.0
    %102 = vmatpush1.xpose.msra.mxu0 0.0
    %103 = vmatprep.subr.mxu0 0.0
    %104 = vmatpush1.xpose.msra.mxu0 0.0
    %105 = vmatprep.subr.mxu0 0.0
    %106 = vmatpush1.xpose.msra.mxu0 0.0
    %107 = vmatprep.subr.mxu0 0.0
    %108 = vmatpush1.xpose.msra.mxu0 0.0
    %109 = vmatprep.subr.mxu0 0.0
    %110 = vmatpush1.xpose.msra.mxu0 0.0
    %111 = vmatprep.subr.mxu0 0.0
    %112 = vmatpush1.xpose.msra.mxu0 0.0
    %113 = vmatprep.subr.mxu0 0.0
    %114 = vmatpush1.xpose.msra.mxu0 0.0
    %115 = vmatprep.subr.mxu0 0.0
    %116 = vmatpush1.xpose.msra.mxu0 0.0
    %117 = vmatprep.subr.mxu0 0.0
    %118 = vmatpush1.xpose.msra.mxu0 0.0
    %119 = vmatprep.subr.mxu0 0.0
    %120 = vmatpush1.xpose.msra.mxu0 0.0
    %121 = vmatprep.mubr.f32.mxu0 0.0
    %122 = vmatmul.mubr.f32.gmra.mrb[0].mxu0 %v40
    %v123 = vpop.f32.mrb[0].mxu0
    %v124 = vadd.f32 0.0, %v123
    %v125 = vpop.f32.mrb[0].mxu0
    %126 = vdwg.mxu0
    %v127 = vmul.f32 %v40, %v40
    %128 = vadd.xlane.f32.xlu0 %v127
    %v129 = vpop.xlane.xlu0 %128
    %v130 = vrsqrt.pop %v129
    %v131 = vmul.f32 %v124, %v130
    %s132 = smul.u32 0, 8
    %v133 = vlaneseq
    %v134 = vshrl.u32 %v133, 7
    %v135 = vstv %s132
    %v136 = vadd.s32 %v135, %v134
    %vm137 = vcmp.lt.s32.totalorder %v136, 2
    %vm138 = vcmp.gt.f32.partialorder %v131, 0.26
    %vm139 = vmand %vm137, %vm138
    %v140 = vsub.f32 1.0, %v131
    %v141 = vlog2.pop %v140
    %v142 = vmul.f32 %v141, 0.6931472
    %v143 = vsel %vm139, %v142, 0.0
    %144 = vadd.xlane.f32.xlu0 %v143
    %v145 = vpop.xlane.xlu0 %144
    %v146 = vrot.slane %v145, 4
    %v147 = vadd.f32 %v145, %v146
    %v148 = vrot.slane %v147, 2
    %v149 = vadd.f32 %v147, %v148
    %v150 = vrot.slane %v149, 1
    %v151 = vadd.f32 %v149, %v150
    %s152 = vtos %v151
    %s153 = ssub.f32 0.0, %s152
    %v154 = vstv %s153
    %155 = vst [vmem:[#allocation7] sm:$0x1] %v154
    // Predicated region
    $region18: #{tpu_custom_call.1} parent=1 // pred_check
      _
    $region19: #{tpu_custom_call.1} parent=1 // pred_check_branch
      %157 = sbr.rel (0) target = $region21
    $region20: #{tpu_custom_call.1} parent=1 // pred_region
      %s159 = ssub.s32 16, 16
      %160 = vsyncadd [#allocation4], %s159
      %s162 = sshll.u32 [#allocation7], 4
      %s163 = int_to_ptr.vmem [resolvable:$true] %s162
      %165 = dma.vmem_to_hbm [thread:$0]  %s163, 16, %s2, [#allocation4]
    $region21: #{tpu_custom_call.1} parent=1 // pred_fallthru
      _
    // Predicated region
    $region22: #{tpu_custom_call.1} parent=1 // pred_check
      _
    $region23: #{tpu_custom_call.1} parent=1 // pred_check_branch
      %167 = sbr.rel (0) target = $region25
    $region24: #{tpu_custom_call.1} parent=1 // pred_region
      %168 = dma.done [#allocation4], 16
    $region25: #{tpu_custom_call.1} parent=1 // pred_fallthru
      _
    %169 = vsyncpa [#allocation3], 1
    %170 = vsyncpa [#allocation6], 1
    %171 = vsyncpa [#allocation4], 1

</llo_original>
